<compile_context>
chip_gen: v6e
topology: v6e:2x2x1
jax: 0.10.0
libtpu: 0.0.40
codegen_flags: <defaults>
</compile_context>

<pallas_src>
import jax
import jax.numpy as jnp
from jax.experimental import pallas as pl
from jax.experimental.pallas import tpu as pltpu


_LANE_CANDIDATES = (4096, 2048, 1024, 512, 256, 128)


def _softplus_signed(x_f32, negate):
    # softplus(s*x) = max(s*x, 0) + log(1 + exp(-|x|)); the tail is sign-free.
    # jnp.log(1+..) (instead of log1p) keeps the proven Mosaic lowering; the
    # precision delta for large |x| is far below the loss tolerance.
    tail = jnp.log(1.0 + jnp.exp(-jnp.abs(x_f32)))
    lin = jnp.maximum(-x_f32 if negate else x_f32, 0.0)
    return lin + tail


def _make_kernel(*, m_total, tile_rows, lane, inv_count, has_weight):
    needs_mask = (m_total % tile_rows) != 0
    groups = tile_rows // 8

    def kernel(*refs):
        if has_weight:
            xr_ref, xf_ref, w_ref, out_ref, acc_ref = refs
        else:
            xr_ref, xf_ref, out_ref, acc_ref = refs

        p = pl.program_id(0)   # 0 -> real (softplus(-x)), 1 -> fake (softplus(x))
        k = pl.program_id(1)
        nk = pl.num_programs(1)

        @pl.when(k == 0)
        def _init():
            acc_ref[...] = jnp.zeros_like(acc_ref)

        def tile_partial(x_ref, negate, masked):
            x = x_ref[...].astype(jnp.float32)          # upcast in-kernel
            sp = _softplus_signed(x, negate)
            if masked:
                row = jax.lax.broadcasted_iota(jnp.int32, (tile_rows, 1), 0)
                sp = jnp.where(row + k * tile_rows < m_total, sp, 0.0)
            # Sublane-group reduce (pure vreg adds) down to (8, lane).
            return sp.reshape(groups, 8, lane).sum(axis=0)

        def accumulate(x_ref, negate):
            if needs_mask:
                # Only the last (ragged) tile pays for iota/compare/select.
                @pl.when(k == nk - 1)
                def _tail():
                    acc_ref[...] += tile_partial(x_ref, negate, True)

                @pl.when(k != nk - 1)
                def _body():
                    acc_ref[...] += tile_partial(x_ref, negate, False)
            else:
                acc_ref[...] += tile_partial(x_ref, negate, False)

        @pl.when(p == 0)
        def _real():
            accumulate(xr_ref, True)

        @pl.when(p == 1)
        def _fake():
            accumulate(xf_ref, False)

        @pl.when(k == nk - 1)
        def _finalize():
            acc = acc_ref[...]
            if has_weight:
                # Weight only varies along the lane (H*W) axis, so the multiply
                # is algebraically movable to the finalize step.
                acc = acc * w_ref[...].astype(jnp.float32)
            loss = jnp.sum(acc) * inv_count
            out_ref[...] = jnp.full(out_ref.shape, loss, dtype=jnp.float32)

    return kernel


def _vmem_limit_bytes():
    cap = None
    try:
        cap = getattr(pltpu.get_tpu_info(), "vmem_capacity_bytes", None)
    except Exception:
        cap = None
    if cap is not None and cap >= 128 * 1024 * 1024:
        return 64 * 1024 * 1024     # v5e / v6e: 128 MiB physical VMEM
    return 40 * 1024 * 1024         # v7x (64 MiB physical) or unknown


def _pick_tile_rows(lead, lane, itemsize):
    """~4 MiB per streamed tile; both predictions keep a double-buffered window
    (~4x tile total) so this stays well under the scoped-VMEM limits above.
    Rows are a multiple of 8 (sublane dense)."""
    target_bytes = 4 * 1024 * 1024
    tm = target_bytes // max(1, lane * itemsize)
    tm = max(8, (int(tm) // 8) * 8)
    lead_up = ((lead + 7) // 8) * 8
    return int(min(tm, lead_up))


def _layout(shape, total, has_weight):
    if len(shape) >= 2:
        lane = int(shape[-2] * shape[-1])
    else:
        lane = total
    lead = total // lane
    if not has_weight and (lane % 128 != 0 or lead == 1):
        # Unweighted: pick a lane-dense 128-aligned layout when possible.
        # TODO(synk): totals with no multiple-of-128 divisor keep the native
        # (lane-wasteful) layout; a pad+mask re-tiling was skipped.
        for cand in _LANE_CANDIDATES:
            if total % cand == 0:
                lane, lead = cand, total // cand
                break
    # TODO(synk): weighted path keeps lane = H*W even when it is not
    # 128-aligned (correct, just lane-wasteful for exotic spatial sizes).
    return lead, lane


def _fused_losses(pred_real, pred_fake, weight=None):
    shape = tuple(pred_real.shape)
    total = int(pred_real.size)
    has_weight = weight is not None
    if has_weight:
        if len(shape) < 2 or tuple(weight.shape[-2:]) != shape[-2:]:
            raise ValueError("weight must match the last two dims of the predictions")
    lead, lane = _layout(shape, total, has_weight)

    xr = pred_real.reshape(lead, lane)      # native dtype pass-through (bf16 streams thin)
    xf = pred_fake.reshape(lead, lane)

    tm = _pick_tile_rows(lead, lane, jnp.dtype(xr.dtype).itemsize)
    kt = pl.cdiv(lead, tm)
    inv_count = 1.0 / float(total)

    kernel = _make_kernel(m_total=lead, tile_rows=tm, lane=lane,
                          inv_count=inv_count, has_weight=has_weight)

    in_specs = [
        # Real walks its tiles only during p==0; pinned to block 0 otherwise
        # (no re-fetch while pinned -> at most one redundant tile DMA).
        pl.BlockSpec((tm, lane), lambda p, k: (k * (1 - p), 0)),
        # Fake walks its tiles only during p==1.
        pl.BlockSpec((tm, lane), lambda p, k: (k * p, 0)),
    ]
    args = [xr, xf]
    if has_weight:
        in_specs.append(pl.BlockSpec((1, lane), lambda p, k: (0, 0)))  # resident
        args.append(weight.reshape(1, lane))

    out = pl.pallas_call(
        kernel,
        out_shape=jax.ShapeDtypeStruct((2, 8, 128), jnp.float32),
        grid_spec=pltpu.PrefetchScalarGridSpec(
            num_scalar_prefetch=0,
            grid=(2, kt),
            in_specs=in_specs,
            out_specs=pl.BlockSpec((1, 8, 128), lambda p, k: (p, 0, 0)),
            scratch_shapes=[pltpu.VMEM((8, lane), jnp.float32)],
        ),
        compiler_params=pltpu.CompilerParams(
            # p axis: real on TC0 / fake on TC1 on v7x megacore; harmless on 1-TC chips.
            dimension_semantics=("parallel", "arbitrary"),
            vmem_limit_bytes=_vmem_limit_bytes(),
        ),
    )(*args)
    return out[0, 0, 0], out[1, 0, 0]


def non_saturating_logistic_discriminator_loss(prediction_real, prediction_fake,
                                               weight=None):
    """Functional equivalent of NonSaturatingLogisticDiscriminatorLoss.forward."""
    if (tuple(prediction_real.shape) == tuple(prediction_fake.shape)
            and prediction_real.dtype == prediction_fake.dtype):
        return _fused_losses(prediction_real, prediction_fake, weight)
    # TODO(synk): mismatched real/fake shapes (unusual for a GAN discriminator)
    # fall back to two fused calls instead of a shape-heterogeneous kernel.
    loss_real, _ = _fused_losses(prediction_real, prediction_real, weight)
    _, loss_fake = _fused_losses(prediction_fake, prediction_fake, weight)
    return loss_real, loss_fake


def _reference(prediction_real, prediction_fake, weight=None):
    pr = prediction_real.astype(jnp.float32)
    pf = prediction_fake.astype(jnp.float32)
    sp_r = jax.nn.softplus(-pr)
    sp_f = jax.nn.softplus(pf)
    if weight is not None:
        w = weight.astype(jnp.float32).reshape((1,) * (pr.ndim - 2) + pr.shape[-2:])
        sp_r = sp_r * w
        sp_f = sp_f * w
    return jnp.mean(sp_r), jnp.mean(sp_f)


if __name__ == "__main__":
    key = jax.random.PRNGKey(0)
    k1, k2, k3 = jax.random.split(key, 3)
    # Multi-StyleGAN discriminator emits a 5-D prediction map: [B, C, T, H, W].
    B, C, T, H, W = 2, 4, 8, 16, 16
    pred_real = jax.random.normal(k1, (B, C, T, H, W), dtype=jnp.float32)
    pred_fake = jax.random.normal(k2, (B, C, T, H, W), dtype=jnp.float32)
    weight = jax.random.uniform(k3, (H, W), dtype=jnp.float32)

    # Unweighted path.
    lr, lf = non_saturating_logistic_discriminator_loss(pred_real, pred_fake)
    jax.block_until_ready((lr, lf))
    ref_lr, ref_lf = _reference(pred_real, pred_fake)
    assert jnp.allclose(lr, ref_lr, rtol=1e-5, atol=1e-6), (lr, ref_lr)
    assert jnp.allclose(lf, ref_lf, rtol=1e-5, atol=1e-6), (lf, ref_lf)

    # Weighted path.
    lrw, lfw = non_saturating_logistic_discriminator_loss(pred_real, pred_fake, weight)
    jax.block_until_ready((lrw, lfw))
    ref_lrw, ref_lfw = _reference(pred_real, pred_fake, weight)
    assert jnp.allclose(lrw, ref_lrw, rtol=1e-5, atol=1e-6), (lrw, ref_lrw)
    assert jnp.allclose(lfw, ref_lfw, rtol=1e-5, atol=1e-6), (lfw, ref_lfw)

    print("KERNEL_OK")
</pallas_src>

<mosaic_0001>
module attributes {stable_mosaic.version = 11 : i64} {
  func.func @kernel(%arg0: i32, %arg1: i32, %arg2: memref<64x256xf32, #tpu.memory_space<vmem>>, %arg3: memref<64x256xf32, #tpu.memory_space<vmem>>, %arg4: memref<1x8x128xf32, #tpu.memory_space<vmem>>, %arg5: memref<8x256xf32, #tpu.memory_space<vmem>>) attributes {dimension_semantics = [#tpu.dimension_semantics<parallel>, #tpu.dimension_semantics<arbitrary>], iteration_bounds = array<i64: 2, 1>, scalar_prefetch = 0 : i64, scratch_operands = 1 : i64, tpu.core_type = #tpu.core_type<tc>, window_params = [{transform_indices = @transform_0, window_bounds = array<i64: 64, 256>}, {transform_indices = @transform_1, window_bounds = array<i64: 64, 256>}, {transform_indices = @transform_2, window_bounds = array<i64: 1, 8, 128>}]} {
    %c0_i32 = arith.constant 0 : i32
    %0 = arith.cmpi eq, %arg1, %c0_i32 : i32
    %1 = arith.extui %0 : i1 to i32
    %c0_i32_0 = arith.constant 0 : i32
    %2 = arith.cmpi ne, %1, %c0_i32_0 : i32
    scf.if %2 {
      %cst = arith.constant 0.000000e+00 : f32
      %12 = vector.broadcast %cst : f32 to vector<8x256xf32>
      %c0 = arith.constant 0 : index
      %c0_6 = arith.constant 0 : index
      %13 = vector.load %arg5[%c0, %c0_6] : memref<8x256xf32, #tpu.memory_space<vmem>>, vector<8x256xf32>
      tpu.vector_store %arg5[%c0, %c0_6], %12 {strides = array<i32>} : memref<8x256xf32, #tpu.memory_space<vmem>>, vector<8x256xf32>,
    } else {
    }
    %c0_i32_1 = arith.constant 0 : i32
    %3 = arith.cmpi eq, %arg0, %c0_i32_1 : i32
    %4 = arith.extui %3 : i1 to i32
    %c0_i32_2 = arith.constant 0 : i32
    %5 = arith.cmpi ne, %4, %c0_i32_2 : i32
    scf.if %5 {
      %c0 = arith.constant 0 : index
      %c0_6 = arith.constant 0 : index
      %12 = vector.load %arg5[%c0, %c0_6] : memref<8x256xf32, #tpu.memory_space<vmem>>, vector<8x256xf32>
      %c0_7 = arith.constant 0 : index
      %c0_8 = arith.constant 0 : index
      %13 = vector.load %arg2[%c0_7, %c0_8] : memref<64x256xf32, #tpu.memory_space<vmem>>, vector<64x256xf32>
      %14 = math.absf %13 : vector<64x256xf32>
      %cst = arith.constant 0.000000e+00 : f32
      %15 = vector.broadcast %cst : f32 to vector<64x256xf32>
      %16 = arith.subf %15, %14 : vector<64x256xf32>
      %17 = math.exp %16 : vector<64x256xf32>
      %cst_9 = arith.constant 1.000000e+00 : f32
      %18 = vector.broadcast %cst_9 : f32 to vector<64x256xf32>
      %19 = arith.addf %18, %17 : vector<64x256xf32>
      %20 = math.log %19 : vector<64x256xf32>
      %cst_10 = arith.constant 0.000000e+00 : f32
      %21 = vector.broadcast %cst_10 : f32 to vector<64x256xf32>
      %22 = arith.subf %21, %13 : vector<64x256xf32>
      %cst_11 = arith.constant 0.000000e+00 : f32
      %23 = vector.broadcast %cst_11 : f32 to vector<64x256xf32>
      %24 = arith.maximumf %22, %23 : vector<64x256xf32>
      %25 = arith.addf %24, %20 : vector<64x256xf32>
      %26 = vector.shape_cast %25 : vector<64x256xf32> to vector<8x8x256xf32>
      %cst_12 = arith.constant dense<0.000000e+00> : vector<8x256xf32>
      %27 = vector.multi_reduction <add>, %26, %cst_12 [0] : vector<8x8x256xf32> to vector<8x256xf32>
      %28 = arith.addf %12, %27 : vector<8x256xf32>
      %c0_13 = arith.constant 0 : index
      %c0_14 = arith.constant 0 : index
      %29 = vector.load %arg5[%c0_13, %c0_14] : memref<8x256xf32, #tpu.memory_space<vmem>>, vector<8x256xf32>
      tpu.vector_store %arg5[%c0_13, %c0_14], %28 {strides = array<i32>} : memref<8x256xf32, #tpu.memory_space<vmem>>, vector<8x256xf32>,
    } else {
    }
    %c1_i32 = arith.constant 1 : i32
    %6 = arith.cmpi eq, %arg0, %c1_i32 : i32
    %7 = arith.extui %6 : i1 to i32
    %c0_i32_3 = arith.constant 0 : i32
    %8 = arith.cmpi ne, %7, %c0_i32_3 : i32
    scf.if %8 {
      %c0 = arith.constant 0 : index
      %c0_6 = arith.constant 0 : index
      %12 = vector.load %arg5[%c0, %c0_6] : memref<8x256xf32, #tpu.memory_space<vmem>>, vector<8x256xf32>
      %c0_7 = arith.constant 0 : index
      %c0_8 = arith.constant 0 : index
      %13 = vector.load %arg3[%c0_7, %c0_8] : memref<64x256xf32, #tpu.memory_space<vmem>>, vector<64x256xf32>
      %14 = math.absf %13 : vector<64x256xf32>
      %cst = arith.constant 0.000000e+00 : f32
      %15 = vector.broadcast %cst : f32 to vector<64x256xf32>
      %16 = arith.subf %15, %14 : vector<64x256xf32>
      %17 = math.exp %16 : vector<64x256xf32>
      %cst_9 = arith.constant 1.000000e+00 : f32
      %18 = vector.broadcast %cst_9 : f32 to vector<64x256xf32>
      %19 = arith.addf %18, %17 : vector<64x256xf32>
      %20 = math.log %19 : vector<64x256xf32>
      %cst_10 = arith.constant 0.000000e+00 : f32
      %21 = vector.broadcast %cst_10 : f32 to vector<64x256xf32>
      %22 = arith.maximumf %13, %21 : vector<64x256xf32>
      %23 = arith.addf %22, %20 : vector<64x256xf32>
      %24 = vector.shape_cast %23 : vector<64x256xf32> to vector<8x8x256xf32>
      %cst_11 = arith.constant dense<0.000000e+00> : vector<8x256xf32>
      %25 = vector.multi_reduction <add>, %24, %cst_11 [0] : vector<8x8x256xf32> to vector<8x256xf32>
      %26 = arith.addf %12, %25 : vector<8x256xf32>
      %c0_12 = arith.constant 0 : index
      %c0_13 = arith.constant 0 : index
      %27 = vector.load %arg5[%c0_12, %c0_13] : memref<8x256xf32, #tpu.memory_space<vmem>>, vector<8x256xf32>
      tpu.vector_store %arg5[%c0_12, %c0_13], %26 {strides = array<i32>} : memref<8x256xf32, #tpu.memory_space<vmem>>, vector<8x256xf32>,
    } else {
    }
    %c0_i32_4 = arith.constant 0 : i32
    %9 = arith.cmpi eq, %arg1, %c0_i32_4 : i32
    %10 = arith.extui %9 : i1 to i32
    %c0_i32_5 = arith.constant 0 : i32
    %11 = arith.cmpi ne, %10, %c0_i32_5 : i32
    scf.if %11 {
      %c0 = arith.constant 0 : index
      %c0_6 = arith.constant 0 : index
      %12 = vector.load %arg5[%c0, %c0_6] : memref<8x256xf32, #tpu.memory_space<vmem>>, vector<8x256xf32>
      %13 = vector.shape_cast %12 : vector<8x256xf32> to vector<1x8x256xf32>
      %cst = arith.constant dense<0.000000e+00> : vector<1xf32>
      %14 = vector.multi_reduction <add>, %13, %cst [1, 2] : vector<1x8x256xf32> to vector<1xf32>
      %15 = vector.shape_cast %14 : vector<1xf32> to vector<1x1x1xf32>
      %16 = vector.extract %15[0, 0, 0] : f32 from vector<1x1x1xf32>
      %cst_7 = arith.constant 6.10351563E-5 : f32
      %17 = arith.mulf %16, %cst_7 : f32
      %18 = vector.broadcast %17 : f32 to vector<1x8x128xf32>
      %c0_8 = arith.constant 0 : index
      %c0_9 = arith.constant 0 : index
      %c0_10 = arith.constant 0 : index
      %19 = vector.load %arg4[%c0_8, %c0_9, %c0_10] : memref<1x8x128xf32, #tpu.memory_space<vmem>>, vector<1x8x128xf32>
      tpu.vector_store %arg4[%c0_8, %c0_9, %c0_10], %18 {strides = array<i32>} : memref<1x8x128xf32, #tpu.memory_space<vmem>>, vector<1x8x128xf32>,
    } else {
    }
    return
  }
  func.func @transform_0(%arg0: i32, %arg1: i32) -> (i32, i32) {
    %c1_i32 = arith.constant 1 : i32
    %0 = arith.subi %c1_i32, %arg0 : i32
    %1 = arith.muli %arg1, %0 : i32
    %c0_i32 = arith.constant 0 : i32
    %c0_i32_0 = arith.constant 0 : i32
    return %1, %c0_i32 : i32, i32
  }
  func.func @transform_1(%arg0: i32, %arg1: i32) -> (i32, i32) {
    %0 = arith.muli %arg1, %arg0 : i32
    %c0_i32 = arith.constant 0 : i32
    %c0_i32_0 = arith.constant 0 : i32
    return %0, %c0_i32 : i32, i32
  }
  func.func @transform_2(%arg0: i32, %arg1: i32) -> (i32, i32, i32) {
    %c0_i32 = arith.constant 0 : i32
    %c0_i32_0 = arith.constant 0 : i32
    %c0_i32_1 = arith.constant 0 : i32
    return %arg0, %c0_i32, %c0_i32_0 : i32, i32, i32
  }
}

</mosaic_0001>

<llo_original>
// kernel: tpu_custom_call.1
$region0: #{tpu_custom_call.1}
  #allocation0 [shape = 'u32[]', space=smem, size = 0x4, offset = 0x4, fixed_abs, tag = 'smem constant byte address 0x4 - core index']
  #allocation1 [shape = 'u32[144,128]{1,0:T(1,128)}', space=vmem, size = 0x12000, scoped, tag = 'internal scratch']
  #allocation2 [shape = 'f32[8,256]{1,0:T(8,128)}', space=vmem, size = 0x2000, scoped, tag = 'scratch operand']
  %s0 = inlined_call_operand.hbm [shape: f32[64,256], index: 0, kind: input, shape index: {}]
  %s1 = inlined_call_operand.hbm [shape: f32[64,256], index: 1, kind: input, shape index: {}]
  %s2 = inlined_call_operand.hbm [shape: f32[2,8,128], index: 2, kind: output, shape index: {}]
  %s3 = sld [smem:[#allocation0]]
  $region65: #{tpu_custom_call.1} parent=0
    _
  %s5 = ssub.s32 1, %s3
  %s6 = scalar_select 0, %s5, %s3
  $region1: #{tpu_custom_call.1} parent=0
    #allocation3 [shape = 'u8[131072]{0}', space=vmem, size = 0x20000, scoped, tag = 'input window, operand 0']
    #allocation4 [shape = 's32[2]{0}', space=sflag, size = 0x8, scoped, tag = 'scoped memory for tpu_custom_call.1']
    #allocation5 [shape = 's32[2]{0}', space=sflag, size = 0x8, scoped, tag = 'scoped memory for tpu_custom_call.1']
    #allocation6 [shape = 'u8[131072]{0}', space=vmem, size = 0x20000, scoped, tag = 'input window, operand 1']
    #allocation7 [shape = 's32[2]{0}', space=sflag, size = 0x8, scoped, tag = 'scoped memory for tpu_custom_call.1']
    #allocation8 [shape = 'u8[8192]{0}', space=vmem, size = 0x2000, scoped, tag = 'output window, operand 0']
    %7 = vsyncpa [#allocation4], 0
    %s8 = scalar_lea.sflag [#allocation4], 1
    %9 = vsyncpa %s8, 0
    %10 = vsyncpa [#allocation7], 0
    %s11 = scalar_lea.sflag [#allocation7], 1
    %12 = vsyncpa %s11, 0
    %13 = vsyncpa [#allocation5], 0
    %s14 = scalar_lea.sflag [#allocation5], 1
    %15 = vsyncpa %s14, 0
    loop: start=0, step=1, limit=4
    $region2: #{tpu_custom_call.1} parent=1 // loop_pre_header
      _
    $region3: #{tpu_custom_call.1} parent=1 // loop_header
      %s17 = sphi 0, %s21
      %p18 = scmp.ge.s32.totalorder %s17, 4
      %s24 = sphi 0, %s36
      %s25 = sphi 0, %s32
      %s26 = sphi 0, %s24
      %s27 = sphi 0, %s25
      %s28 = sphi 0, %s26
      %s29 = sphi 0, %s27
      %s43 = sphi 0, %s45
      %s46 = sphi 0, %s43
      %s47 = sphi 0, %s46
      %s63 = sphi 0, %s47
      %s71 = sphi 0, %s73
      %s74 = sphi 0, %s71
      %s75 = sphi 0, %s74
      %s91 = sphi 0, %s75
      %s97 = sphi 0, %s99
      %s100 = sphi 0, %s97
      %s101 = sphi 0, %s100
      %s117 = sphi 0, %s101
    $region4: #{tpu_custom_call.1} parent=1 // loop_header_branch
      %20 = sbr.rel (%p18) target = $region8
    $region5: #{tpu_custom_call.1} parent=1 // loop_body
      %s22 = ssub.s32 %s17, 1
      %s23 = ssub.s32 %s17, 2
      %s30 = sadd.s32 1, %s25
      %p31 = scmp.ge.s32.totalorder %s30, 1
      %s32 = scalar_select %p31, 0, %s30
      %s33 = sadd.s32 1, %s24
      %s34 = scalar_select %p31, %s33, %s24
      %p35 = scmp.ge.s32.totalorder %s34, 2
      %s36 = scalar_select %p35, 0, %s34
      %s37 = ssub.s32 1, %s24
      %s38 = smul.u32 %s25, %s37
      %s39 = ssub.s32 1, %s36
      %s40 = smul.u32 %s32, %s39
      %s41 = ssub.s32 %s38, %s40
      %p42 = scmp.eq.s32.totalorder %s41, 0
      %s44 = sadd.s32 %s43, 1
      %s45 = scalar_select %p42, %s43, %s44
      %p48 = pneg %p42
      %p49 = scmp.eq.s32.totalorder %s17, 1
      %p50 = por %p48, %p49
      %p51 = scmp.ne.s32.totalorder %s43, %s46
      %p52 = scmp.eq.s32.totalorder %s17, 0
      %p53 = por %p51, %p52
      %p54 = scmp.ne.s32.totalorder %s43, %s46
      %p55 = scmp.eq.s32.totalorder %s22, 1
      %p56 = por %p54, %p55
      %p57 = scmp.ne.s32.totalorder %s46, %s47
      %p58 = scmp.eq.s32.totalorder %s22, 0
      %p59 = por %p57, %p58
      %p60 = scmp.ne.s32.totalorder %s46, %s47
      %p61 = scmp.eq.s32.totalorder %s23, 1
      %p62 = por %p60, %p61
      %p64 = scmp.ne.s32.totalorder %s47, %s63
      %p65 = scmp.eq.s32.totalorder %s23, 0
      %p66 = por %p64, %p65
      %s67 = smul.u32 %s25, %s24
      %s68 = smul.u32 %s32, %s36
      %s69 = ssub.s32 %s67, %s68
      %p70 = scmp.eq.s32.totalorder %s69, 0
      %s72 = sadd.s32 %s71, 1
      %s73 = scalar_select %p70, %s71, %s72
      %p76 = pneg %p70
      %p77 = scmp.eq.s32.totalorder %s17, 1
      %p78 = por %p76, %p77
      %p79 = scmp.ne.s32.totalorder %s71, %s74
      %p80 = scmp.eq.s32.totalorder %s17, 0
      %p81 = por %p79, %p80
      %p82 = scmp.ne.s32.totalorder %s71, %s74
      %p83 = scmp.eq.s32.totalorder %s22, 1
      %p84 = por %p82, %p83
      %p85 = scmp.ne.s32.totalorder %s74, %s75
      %p86 = scmp.eq.s32.totalorder %s22, 0
      %p87 = por %p85, %p86
      %p88 = scmp.ne.s32.totalorder %s74, %s75
      %p89 = scmp.eq.s32.totalorder %s23, 1
      %p90 = por %p88, %p89
      %p92 = scmp.ne.s32.totalorder %s75, %s91
      %p93 = scmp.eq.s32.totalorder %s23, 0
      %p94 = por %p92, %p93
      %s95 = ssub.s32 %s24, %s36
      %p96 = scmp.eq.s32.totalorder %s95, 0
      %s98 = sadd.s32 %s97, 1
      %s99 = scalar_select %p96, %s97, %s98
      %p102 = pneg %p96
      %p103 = scmp.eq.s32.totalorder %s17, 1
      %p104 = por %p102, %p103
      %p105 = scmp.ne.s32.totalorder %s97, %s100
      %p106 = scmp.eq.s32.totalorder %s17, 0
      %p107 = por %p105, %p106
      %p108 = scmp.ne.s32.totalorder %s97, %s100
      %p109 = scmp.eq.s32.totalorder %s22, 1
      %p110 = por %p108, %p109
      %p111 = scmp.ne.s32.totalorder %s100, %s101
      %p112 = scmp.eq.s32.totalorder %s22, 0
      %p113 = por %p111, %p112
      %p114 = scmp.ne.s32.totalorder %s100, %s101
      %p115 = scmp.eq.s32.totalorder %s23, 1
      %p116 = por %p114, %p115
      %p118 = scmp.ne.s32.totalorder %s101, %s117
      %p119 = scmp.eq.s32.totalorder %s23, 0
      %p120 = por %p118, %p119
      %p121 = scmp.le.s32.totalorder 1, %s17
      %p122 = scmp.lt.s32.totalorder %s17, 3
      %p123 = pnand %p121, %p122
      %p124 = pneg %p123
      // Predicated region
      $region9: #{tpu_custom_call.1} parent=5 // pred_check
        _
      $region10: #{tpu_custom_call.1} parent=5 // pred_check_branch
        %126 = sbr.rel (%p123) target = $region12
      $region11: #{tpu_custom_call.1} parent=5 // pred_region
        %s127 = ssub.s32 %s17, 1
      $region12: #{tpu_custom_call.1} parent=5 // pred_fallthru
        _
      %p128 = scmp.lt.s32.totalorder %s17, 2
      // Predicated region
      $region13: #{tpu_custom_call.1} parent=5 // pred_check
        %p129 = pneg %p128
      $region14: #{tpu_custom_call.1} parent=5 // pred_check_branch
        %131 = sbr.rel (%p129) target = $region16
      $region15: #{tpu_custom_call.1} parent=5 // pred_region
        // Predicated region
        $region17: #{tpu_custom_call.1} parent=15 // pred_check
          %p132 = pneg %p53
        $region18: #{tpu_custom_call.1} parent=15 // pred_check_branch
          %134 = sbr.rel (%p132) target = $region20
        $region19: #{tpu_custom_call.1} parent=15 // pred_region
          %s135 = sand.u32 %s43, 1
          %s136 = scalar_lea.sflag [#allocation4], %s135
          %s137 = sand.u32 %s43, 1
          %s138 = smul.addr %s137, 128
          %s139 = scalar_lea.vmem [#allocation3], %s138
          %s140 = ssub.s32 1, %s24
          %s141 = smul.u32 %s25, %s140
          %s142 = smul.u32 8, %s141
          %s144 = ssub.s32 2048, 2048
          %145 = vsyncadd %s136, %s144
          %s146 = smul.addr %s142, 2
          %s147 = smul.addr %s146, 128
          %s148 = scalar_lea.hbm %s0, %s147
          %s149 = sshll.u32 %s139, 4
          %s150 = int_to_ptr.vmem [resolvable:$true] %s149
          %155 = dma.hbm_to_vmem [thread:$0]  %s148, 2048, %s150, %s136, 256, 256, 16
        $region20: #{tpu_custom_call.1} parent=15 // pred_fallthru
          _
        // Predicated region
        $region21: #{tpu_custom_call.1} parent=15 // pred_check
          %p156 = pneg %p81
        $region22: #{tpu_custom_call.1} parent=15 // pred_check_branch
          %158 = sbr.rel (%p156) target = $region24
        $region23: #{tpu_custom_call.1} parent=15 // pred_region
          %s159 = sand.u32 %s71, 1
          %s160 = scalar_lea.sflag [#allocation7], %s159
          %s161 = sand.u32 %s71, 1
          %s162 = smul.addr %s161, 128
          %s163 = scalar_lea.vmem [#allocation6], %s162
          %s164 = smul.u32 %s25, %s24
          %s165 = smul.u32 8, %s164
          %s167 = ssub.s32 2048, 2048
          %168 = vsyncadd %s160, %s167
          %s169 = smul.addr %s165, 2
          %s170 = smul.addr %s169, 128
          %s171 = scalar_lea.hbm %s1, %s170
          %s172 = sshll.u32 %s163, 4
          %s173 = int_to_ptr.vmem [resolvable:$true] %s172
          %178 = dma.hbm_to_vmem [thread:$0]  %s171, 2048, %s173, %s160, 256, 256, 16
        $region24: #{tpu_custom_call.1} parent=15 // pred_fallthru
          _
      $region16: #{tpu_custom_call.1} parent=5 // pred_fallthru
        _
      %p179 = scmp.le.s32.totalorder 1, %s17
      %p180 = scmp.lt.s32.totalorder %s17, 3
      %p181 = pnand %p179, %p180
      %p182 = pneg %p181
      // Predicated region
      $region25: #{tpu_custom_call.1} parent=5 // pred_check
        _
      $region26: #{tpu_custom_call.1} parent=5 // pred_check_branch
        %184 = sbr.rel (%p181) target = $region28
      $region27: #{tpu_custom_call.1} parent=5 // pred_region
        %s185 = ssub.s32 %s17, 1
        %s186 = sand.u32 %s46, 1
        %s187 = scalar_lea.sflag [#allocation4], %s186
        %s188 = sand.u32 %s46, 1
        %s189 = smul.addr %s188, 128
        %s190 = scalar_lea.vmem [#allocation3], %s189
        // Predicated region
        $region29: #{tpu_custom_call.1} parent=27 // pred_check
          %p191 = pneg %p59
        $region30: #{tpu_custom_call.1} parent=27 // pred_check_branch
          %193 = sbr.rel (%p191) target = $region32
        $region31: #{tpu_custom_call.1} parent=27 // pred_region
          %194 = dma.done %s187, 2048
        $region32: #{tpu_custom_call.1} parent=27 // pred_fallthru
          _
        %s195 = sand.u32 %s74, 1
        %s196 = scalar_lea.sflag [#allocation7], %s195
        %s197 = sand.u32 %s74, 1
        %s198 = smul.addr %s197, 128
        %s199 = scalar_lea.vmem [#allocation6], %s198
        // Predicated region
        $region33: #{tpu_custom_call.1} parent=27 // pred_check
          %p200 = pneg %p87
        $region34: #{tpu_custom_call.1} parent=27 // pred_check_branch
          %202 = sbr.rel (%p200) target = $region36
        $region35: #{tpu_custom_call.1} parent=27 // pred_region
          %203 = dma.done %s196, 2048
        $region36: #{tpu_custom_call.1} parent=27 // pred_fallthru
          _
        %s204 = sand.u32 %s46, 1
        %s205 = scalar_lea.sflag [#allocation4], %s204
        %s206 = sand.u32 %s46, 1
        %s207 = smul.addr %s206, 128
        %s208 = scalar_lea.vmem [#allocation3], %s207
        %p209 = pneg %p59
        %p210 = pneg %p56
        %s211 = sand.u32 %s74, 1
        %s212 = scalar_lea.sflag [#allocation7], %s211
        %s213 = sand.u32 %s74, 1
        %s214 = smul.addr %s213, 128
        %s215 = scalar_lea.vmem [#allocation6], %s214
        %p216 = pneg %p87
        %p217 = pneg %p84
        %p218 = pneg %p113
        %p219 = pneg %p110
        %s220 = sand.u32 %s100, 1
        %s221 = scalar_lea.sflag [#allocation5], %s220
        %s222 = sand.u32 %s100, 1
        %s223 = smul.addr %s222, 8
        %s224 = scalar_lea.vmem [#allocation8], %s223
        %s225 = ssub.s32 1, %s26
        %s226 = smul.u32 %s27, %s225
        %s227 = smul.u32 8, %s226
        %s228 = smul.u32 %s27, %s26
        %s229 = smul.u32 8, %s228
        %p230 = scmp.eq.s32.totalorder %s27, 0
        // Predicated region
        $region37: #{tpu_custom_call.1} parent=27 // pred_check
          %p231 = pneg %p230
        $region38: #{tpu_custom_call.1} parent=27 // pred_check_branch
          %233 = sbr.rel (%p231) target = $region40
        $region39: #{tpu_custom_call.1} parent=27 // pred_region
          %234 = vst [vmem:[#allocation2] sm:$0xff] 0.0
          %235 = vst [vmem:[#allocation2 + $0x8] sm:$0xff] 0.0
        $region40: #{tpu_custom_call.1} parent=27 // pred_fallthru
          _
        %p236 = scmp.eq.s32.totalorder %s26, 0
        // Predicated region
        $region41: #{tpu_custom_call.1} parent=27 // pred_check
          %p237 = pneg %p236
        $region42: #{tpu_custom_call.1} parent=27 // pred_check_branch
          %239 = sbr.rel (%p237) target = $region44
        $region43: #{tpu_custom_call.1} parent=27 // pred_region
          %v240 = vld [vmem:[#allocation2] sm:$0xff]
          %v241 = vld [vmem:[#allocation2 + $0x8] sm:$0xff]
          %v242 = vld [vmem:[%s190] sm:$0xff]
          %v243 = vld [vmem:[%s190 + $0x8] sm:$0xff]
          %v244 = vld [vmem:[%s190 + $0x10] sm:$0xff]
          %v245 = vld [vmem:[%s190 + $0x18] sm:$0xff]
          %v246 = vld [vmem:[%s190 + $0x20] sm:$0xff]
          %v247 = vld [vmem:[%s190 + $0x28] sm:$0xff]
          %v248 = vld [vmem:[%s190 + $0x30] sm:$0xff]
          %v249 = vld [vmem:[%s190 + $0x38] sm:$0xff]
          %v250 = vld [vmem:[%s190 + $0x40] sm:$0xff]
          %v251 = vld [vmem:[%s190 + $0x48] sm:$0xff]
          %v252 = vld [vmem:[%s190 + $0x50] sm:$0xff]
          %v253 = vld [vmem:[%s190 + $0x58] sm:$0xff]
          %v254 = vld [vmem:[%s190 + $0x60] sm:$0xff]
          %v255 = vld [vmem:[%s190 + $0x68] sm:$0xff]
          %v256 = vld [vmem:[%s190 + $0x70] sm:$0xff]
          %v257 = vld [vmem:[%s190 + $0x78] sm:$0xff]
          %v258 = vand.u32 2147483647, %v242
          %v259 = vand.u32 2147483647, %v243
          %v260 = vand.u32 2147483647, %v244
          %v261 = vand.u32 2147483647, %v245
          %v262 = vand.u32 2147483647, %v246
          %v263 = vand.u32 2147483647, %v247
          %v264 = vand.u32 2147483647, %v248
          %v265 = vand.u32 2147483647, %v249
          %v266 = vand.u32 2147483647, %v250
          %v267 = vand.u32 2147483647, %v251
          %v268 = vand.u32 2147483647, %v252
          %v269 = vand.u32 2147483647, %v253
          %v270 = vand.u32 2147483647, %v254
          %v271 = vand.u32 2147483647, %v255
          %v272 = vand.u32 2147483647, %v256
          %v273 = vand.u32 2147483647, %v257
          %v274 = vsub.f32 0.0, %v258
          %v275 = vsub.f32 0.0, %v259
          %v276 = vsub.f32 0.0, %v260
          %v277 = vsub.f32 0.0, %v261
          %v278 = vsub.f32 0.0, %v262
          %v279 = vsub.f32 0.0, %v263
          %v280 = vsub.f32 0.0, %v264
          %v281 = vsub.f32 0.0, %v265
          %v282 = vsub.f32 0.0, %v266
          %v283 = vsub.f32 0.0, %v267
          %v284 = vsub.f32 0.0, %v268
          %v285 = vsub.f32 0.0, %v269
          %v286 = vsub.f32 0.0, %v270
          %v287 = vsub.f32 0.0, %v271
          %v288 = vsub.f32 0.0, %v272
          %v289 = vsub.f32 0.0, %v273
          %v290 = vmul.f32 %v274, 1.442695
          %v291 = vpow.pop %v290
          %v292 = vmul.f32 %v275, 1.442695
          %v293 = vpow.pop %v292
          %v294 = vmul.f32 %v276, 1.442695
          %v295 = vpow.pop %v294
          %v296 = vmul.f32 %v277, 1.442695
          %v297 = vpow.pop %v296
          %v298 = vmul.f32 %v278, 1.442695
          %v299 = vpow.pop %v298
          %v300 = vmul.f32 %v279, 1.442695
          %v301 = vpow.pop %v300
          %v302 = vmul.f32 %v280, 1.442695
          %v303 = vpow.pop %v302
          %v304 = vmul.f32 %v281, 1.442695
          %v305 = vpow.pop %v304
          %v306 = vmul.f32 %v282, 1.442695
          %v307 = vpow.pop %v306
          %v308 = vmul.f32 %v283, 1.442695
          %v309 = vpow.pop %v308
          %v310 = vmul.f32 %v284, 1.442695
          %v311 = vpow.pop %v310
          %v312 = vmul.f32 %v285, 1.442695
          %v313 = vpow.pop %v312
          %v314 = vmul.f32 %v286, 1.442695
          %v315 = vpow.pop %v314
          %v316 = vmul.f32 %v287, 1.442695
          %v317 = vpow.pop %v316
          %v318 = vmul.f32 %v288, 1.442695
          %v319 = vpow.pop %v318
          %v320 = vmul.f32 %v289, 1.442695
          %v321 = vpow.pop %v320
          %v322 = vadd.f32 %v291, 1.0
          %v323 = vadd.f32 %v293, 1.0
          %v324 = vadd.f32 %v295, 1.0
          %v325 = vadd.f32 %v297, 1.0
          %v326 = vadd.f32 %v299, 1.0
          %v327 = vadd.f32 %v301, 1.0
          %v328 = vadd.f32 %v303, 1.0
          %v329 = vadd.f32 %v305, 1.0
          %v330 = vadd.f32 %v307, 1.0
          %v331 = vadd.f32 %v309, 1.0
          %v332 = vadd.f32 %v311, 1.0
          %v333 = vadd.f32 %v313, 1.0
          %v334 = vadd.f32 %v315, 1.0
          %v335 = vadd.f32 %v317, 1.0
          %v336 = vadd.f32 %v319, 1.0
          %v337 = vadd.f32 %v321, 1.0
          %v338 = vlog2.pop %v322
          %v339 = vmul.f32 %v338, 0.6931472
          %v340 = vlog2.pop %v323
          %v341 = vmul.f32 %v340, 0.6931472
          %v342 = vlog2.pop %v324
          %v343 = vmul.f32 %v342, 0.6931472
          %v344 = vlog2.pop %v325
          %v345 = vmul.f32 %v344, 0.6931472
          %v346 = vlog2.pop %v326
          %v347 = vmul.f32 %v346, 0.6931472
          %v348 = vlog2.pop %v327
          %v349 = vmul.f32 %v348, 0.6931472
          %v350 = vlog2.pop %v328
          %v351 = vmul.f32 %v350, 0.6931472
          %v352 = vlog2.pop %v329
          %v353 = vmul.f32 %v352, 0.6931472
          %v354 = vlog2.pop %v330
          %v355 = vmul.f32 %v354, 0.6931472
          %v356 = vlog2.pop %v331
          %v357 = vmul.f32 %v356, 0.6931472
          %v358 = vlog2.pop %v332
          %v359 = vmul.f32 %v358, 0.6931472
          %v360 = vlog2.pop %v333
          %v361 = vmul.f32 %v360, 0.6931472
          %v362 = vlog2.pop %v334
          %v363 = vmul.f32 %v362, 0.6931472
          %v364 = vlog2.pop %v335
          %v365 = vmul.f32 %v364, 0.6931472
          %v366 = vlog2.pop %v336
          %v367 = vmul.f32 %v366, 0.6931472
          %v368 = vlog2.pop %v337
          %v369 = vmul.f32 %v368, 0.6931472
          %v370 = vsub.f32 0.0, %v242
          %v371 = vsub.f32 0.0, %v243
          %v372 = vsub.f32 0.0, %v244
          %v373 = vsub.f32 0.0, %v245
          %v374 = vsub.f32 0.0, %v246
          %v375 = vsub.f32 0.0, %v247
          %v376 = vsub.f32 0.0, %v248
          %v377 = vsub.f32 0.0, %v249
          %v378 = vsub.f32 0.0, %v250
          %v379 = vsub.f32 0.0, %v251
          %v380 = vsub.f32 0.0, %v252
          %v381 = vsub.f32 0.0, %v253
          %v382 = vsub.f32 0.0, %v254
          %v383 = vsub.f32 0.0, %v255
          %v384 = vsub.f32 0.0, %v256
          %v385 = vsub.f32 0.0, %v257
          %v386 = vmax.f32 %v370, 0.0
          %v387 = vmax.f32 %v371, 0.0
          %v388 = vmax.f32 %v372, 0.0
          %v389 = vmax.f32 %v373, 0.0
          %v390 = vmax.f32 %v374, 0.0
          %v391 = vmax.f32 %v375, 0.0
          %v392 = vmax.f32 %v376, 0.0
          %v393 = vmax.f32 %v377, 0.0
          %v394 = vmax.f32 %v378, 0.0
          %v395 = vmax.f32 %v379, 0.0
          %v396 = vmax.f32 %v380, 0.0
          %v397 = vmax.f32 %v381, 0.0
          %v398 = vmax.f32 %v382, 0.0
          %v399 = vmax.f32 %v383, 0.0
          %v400 = vmax.f32 %v384, 0.0
          %v401 = vmax.f32 %v385, 0.0
          %v402 = vadd.f32 %v386, %v339
          %v403 = vadd.f32 %v387, %v341
          %v404 = vadd.f32 %v388, %v343
          %v405 = vadd.f32 %v389, %v345
          %v406 = vadd.f32 %v390, %v347
          %v407 = vadd.f32 %v391, %v349
          %v408 = vadd.f32 %v392, %v351
          %v409 = vadd.f32 %v393, %v353
          %v410 = vadd.f32 %v394, %v355
          %v411 = vadd.f32 %v395, %v357
          %v412 = vadd.f32 %v396, %v359
          %v413 = vadd.f32 %v397, %v361
          %v414 = vadd.f32 %v398, %v363
          %v415 = vadd.f32 %v399, %v365
          %v416 = vadd.f32 %v400, %v367
          %v417 = vadd.f32 %v401, %v369
          %v418 = vadd.f32 %v402, %v404
          %v419 = vadd.f32 %v418, %v406
          %v420 = vadd.f32 %v419, %v408
          %v421 = vadd.f32 %v420, %v410
          %v422 = vadd.f32 %v421, %v412
          %v423 = vadd.f32 %v422, %v414
          %v424 = vadd.f32 %v423, %v416
          %v425 = vadd.f32 %v403, %v405
          %v426 = vadd.f32 %v425, %v407
          %v427 = vadd.f32 %v426, %v409
          %v428 = vadd.f32 %v427, %v411
          %v429 = vadd.f32 %v428, %v413
          %v430 = vadd.f32 %v429, %v415
          %v431 = vadd.f32 %v430, %v417
          %v432 = vadd.f32 %v240, %v424
          %v433 = vadd.f32 %v241, %v431
          %434 = vst [vmem:[#allocation2] sm:$0xff] %v432
          %435 = vst [vmem:[#allocation2 + $0x8] sm:$0xff] %v433
        $region44: #{tpu_custom_call.1} parent=27 // pred_fallthru
          _
        %p436 = scmp.eq.s32.totalorder %s26, 1
        // Predicated region
        $region45: #{tpu_custom_call.1} parent=27 // pred_check
          %p437 = pneg %p436
        $region46: #{tpu_custom_call.1} parent=27 // pred_check_branch
          %439 = sbr.rel (%p437) target = $region48
        $region47: #{tpu_custom_call.1} parent=27 // pred_region
          %v440 = vld [vmem:[#allocation2] sm:$0xff]
          %v441 = vld [vmem:[#allocation2 + $0x8] sm:$0xff]
          %v442 = vld [vmem:[%s199] sm:$0xff]
          %v443 = vld [vmem:[%s199 + $0x8] sm:$0xff]
          %v444 = vld [vmem:[%s199 + $0x10] sm:$0xff]
          %v445 = vld [vmem:[%s199 + $0x18] sm:$0xff]
          %v446 = vld [vmem:[%s199 + $0x20] sm:$0xff]
          %v447 = vld [vmem:[%s199 + $0x28] sm:$0xff]
          %v448 = vld [vmem:[%s199 + $0x30] sm:$0xff]
          %v449 = vld [vmem:[%s199 + $0x38] sm:$0xff]
          %v450 = vld [vmem:[%s199 + $0x40] sm:$0xff]
          %v451 = vld [vmem:[%s199 + $0x48] sm:$0xff]
          %v452 = vld [vmem:[%s199 + $0x50] sm:$0xff]
          %v453 = vld [vmem:[%s199 + $0x58] sm:$0xff]
          %v454 = vld [vmem:[%s199 + $0x60] sm:$0xff]
          %v455 = vld [vmem:[%s199 + $0x68] sm:$0xff]
          %v456 = vld [vmem:[%s199 + $0x70] sm:$0xff]
          %v457 = vld [vmem:[%s199 + $0x78] sm:$0xff]
          %v458 = vand.u32 2147483647, %v442
          %v459 = vand.u32 2147483647, %v443
          %v460 = vand.u32 2147483647, %v444
          %v461 = vand.u32 2147483647, %v445
          %v462 = vand.u32 2147483647, %v446
          %v463 = vand.u32 2147483647, %v447
          %v464 = vand.u32 2147483647, %v448
          %v465 = vand.u32 2147483647, %v449
          %v466 = vand.u32 2147483647, %v450
          %v467 = vand.u32 2147483647, %v451
          %v468 = vand.u32 2147483647, %v452
          %v469 = vand.u32 2147483647, %v453
          %v470 = vand.u32 2147483647, %v454
          %v471 = vand.u32 2147483647, %v455
          %v472 = vand.u32 2147483647, %v456
          %v473 = vand.u32 2147483647, %v457
          %v474 = vsub.f32 0.0, %v458
          %v475 = vsub.f32 0.0, %v459
          %v476 = vsub.f32 0.0, %v460
          %v477 = vsub.f32 0.0, %v461
          %v478 = vsub.f32 0.0, %v462
          %v479 = vsub.f32 0.0, %v463
          %v480 = vsub.f32 0.0, %v464
          %v481 = vsub.f32 0.0, %v465
          %v482 = vsub.f32 0.0, %v466
          %v483 = vsub.f32 0.0, %v467
          %v484 = vsub.f32 0.0, %v468
          %v485 = vsub.f32 0.0, %v469
          %v486 = vsub.f32 0.0, %v470
          %v487 = vsub.f32 0.0, %v471
          %v488 = vsub.f32 0.0, %v472
          %v489 = vsub.f32 0.0, %v473
          %v490 = vmul.f32 %v474, 1.442695
          %v491 = vpow.pop %v490
          %v492 = vmul.f32 %v475, 1.442695
          %v493 = vpow.pop %v492
          %v494 = vmul.f32 %v476, 1.442695
          %v495 = vpow.pop %v494
          %v496 = vmul.f32 %v477, 1.442695
          %v497 = vpow.pop %v496
          %v498 = vmul.f32 %v478, 1.442695
          %v499 = vpow.pop %v498
          %v500 = vmul.f32 %v479, 1.442695
          %v501 = vpow.pop %v500
          %v502 = vmul.f32 %v480, 1.442695
          %v503 = vpow.pop %v502
          %v504 = vmul.f32 %v481, 1.442695
          %v505 = vpow.pop %v504
          %v506 = vmul.f32 %v482, 1.442695
          %v507 = vpow.pop %v506
          %v508 = vmul.f32 %v483, 1.442695
          %v509 = vpow.pop %v508
          %v510 = vmul.f32 %v484, 1.442695
          %v511 = vpow.pop %v510
          %v512 = vmul.f32 %v485, 1.442695
          %v513 = vpow.pop %v512
          %v514 = vmul.f32 %v486, 1.442695
          %v515 = vpow.pop %v514
          %v516 = vmul.f32 %v487, 1.442695
          %v517 = vpow.pop %v516
          %v518 = vmul.f32 %v488, 1.442695
          %v519 = vpow.pop %v518
          %v520 = vmul.f32 %v489, 1.442695
          %v521 = vpow.pop %v520
          %v522 = vadd.f32 %v491, 1.0
          %v523 = vadd.f32 %v493, 1.0
          %v524 = vadd.f32 %v495, 1.0
          %v525 = vadd.f32 %v497, 1.0
          %v526 = vadd.f32 %v499, 1.0
          %v527 = vadd.f32 %v501, 1.0
          %v528 = vadd.f32 %v503, 1.0
          %v529 = vadd.f32 %v505, 1.0
          %v530 = vadd.f32 %v507, 1.0
          %v531 = vadd.f32 %v509, 1.0
          %v532 = vadd.f32 %v511, 1.0
          %v533 = vadd.f32 %v513, 1.0
          %v534 = vadd.f32 %v515, 1.0
          %v535 = vadd.f32 %v517, 1.0
          %v536 = vadd.f32 %v519, 1.0
          %v537 = vadd.f32 %v521, 1.0
          %v538 = vlog2.pop %v522
          %v539 = vmul.f32 %v538, 0.6931472
          %v540 = vlog2.pop %v523
          %v541 = vmul.f32 %v540, 0.6931472
          %v542 = vlog2.pop %v524
          %v543 = vmul.f32 %v542, 0.6931472
          %v544 = vlog2.pop %v525
          %v545 = vmul.f32 %v544, 0.6931472
          %v546 = vlog2.pop %v526
          %v547 = vmul.f32 %v546, 0.6931472
          %v548 = vlog2.pop %v527
          %v549 = vmul.f32 %v548, 0.6931472
          %v550 = vlog2.pop %v528
          %v551 = vmul.f32 %v550, 0.6931472
          %v552 = vlog2.pop %v529
          %v553 = vmul.f32 %v552, 0.6931472
          %v554 = vlog2.pop %v530
          %v555 = vmul.f32 %v554, 0.6931472
          %v556 = vlog2.pop %v531
          %v557 = vmul.f32 %v556, 0.6931472
          %v558 = vlog2.pop %v532
          %v559 = vmul.f32 %v558, 0.6931472
          %v560 = vlog2.pop %v533
          %v561 = vmul.f32 %v560, 0.6931472
          %v562 = vlog2.pop %v534
          %v563 = vmul.f32 %v562, 0.6931472
          %v564 = vlog2.pop %v535
          %v565 = vmul.f32 %v564, 0.6931472
          %v566 = vlog2.pop %v536
          %v567 = vmul.f32 %v566, 0.6931472
          %v568 = vlog2.pop %v537
          %v569 = vmul.f32 %v568, 0.6931472
          %v570 = vmax.f32 %v442, 0.0
          %v571 = vmax.f32 %v443, 0.0
          %v572 = vmax.f32 %v444, 0.0
          %v573 = vmax.f32 %v445, 0.0
          %v574 = vmax.f32 %v446, 0.0
          %v575 = vmax.f32 %v447, 0.0
          %v576 = vmax.f32 %v448, 0.0
          %v577 = vmax.f32 %v449, 0.0
          %v578 = vmax.f32 %v450, 0.0
          %v579 = vmax.f32 %v451, 0.0
          %v580 = vmax.f32 %v452, 0.0
          %v581 = vmax.f32 %v453, 0.0
          %v582 = vmax.f32 %v454, 0.0
          %v583 = vmax.f32 %v455, 0.0
          %v584 = vmax.f32 %v456, 0.0
          %v585 = vmax.f32 %v457, 0.0
          %v586 = vadd.f32 %v570, %v539
          %v587 = vadd.f32 %v571, %v541
          %v588 = vadd.f32 %v572, %v543
          %v589 = vadd.f32 %v573, %v545
          %v590 = vadd.f32 %v574, %v547
          %v591 = vadd.f32 %v575, %v549
          %v592 = vadd.f32 %v576, %v551
          %v593 = vadd.f32 %v577, %v553
          %v594 = vadd.f32 %v578, %v555
          %v595 = vadd.f32 %v579, %v557
          %v596 = vadd.f32 %v580, %v559
          %v597 = vadd.f32 %v581, %v561
          %v598 = vadd.f32 %v582, %v563
          %v599 = vadd.f32 %v583, %v565
          %v600 = vadd.f32 %v584, %v567
          %v601 = vadd.f32 %v585, %v569
          %v602 = vadd.f32 %v586, %v588
          %v603 = vadd.f32 %v602, %v590
          %v604 = vadd.f32 %v603, %v592
          %v605 = vadd.f32 %v604, %v594
          %v606 = vadd.f32 %v605, %v596
          %v607 = vadd.f32 %v606, %v598
          %v608 = vadd.f32 %v607, %v600
          %v609 = vadd.f32 %v587, %v589
          %v610 = vadd.f32 %v609, %v591
          %v611 = vadd.f32 %v610, %v593
          %v612 = vadd.f32 %v611, %v595
          %v613 = vadd.f32 %v612, %v597
          %v614 = vadd.f32 %v613, %v599
          %v615 = vadd.f32 %v614, %v601
          %v616 = vadd.f32 %v440, %v608
          %v617 = vadd.f32 %v441, %v615
          %618 = vst [vmem:[#allocation2] sm:$0xff] %v616
          %619 = vst [vmem:[#allocation2 + $0x8] sm:$0xff] %v617
        $region48: #{tpu_custom_call.1} parent=27 // pred_fallthru
          _
        // Predicated region
        $region49: #{tpu_custom_call.1} parent=27 // pred_check
          %p620 = pneg %p230
        $region50: #{tpu_custom_call.1} parent=27 // pred_check_branch
          %622 = sbr.rel (%p620) target = $region52
        $region51: #{tpu_custom_call.1} parent=27 // pred_region
          %v623 = vld [vmem:[#allocation2] sm:$0xff]
          %v624 = vld [vmem:[#allocation2 + $0x8] sm:$0xff]
          %v625 = vadd.f32 %v623, %v624
          %626 = vadd.xlane.f32.xlu0 %v625
          %v627 = vpop.xlane.xlu0 %626
          %v628 = vrot.slane %v627, 4
          %v629 = vadd.f32 %v627, %v628
          %v630 = vrot.slane %v629, 2
          %v631 = vadd.f32 %v629, %v630
          %v632 = vrot.slane %v631, 1
          %v633 = vadd.f32 %v631, %v632
          %s634 = vtos %v633
          %s635 = smul.f32 %s634, 6.1035156e-05
          %v636 = vstv %s635
          %637 = vst [vmem:[%s224] sm:$0xff] %v636
        $region52: #{tpu_custom_call.1} parent=27 // pred_fallthru
          _
        %s638 = sand.u32 %s100, 1
        %s639 = scalar_lea.sflag [#allocation5], %s638
        %s640 = sand.u32 %s100, 1
        %s641 = smul.addr %s640, 8
        %s642 = scalar_lea.vmem [#allocation8], %s641
        // Predicated region
        $region53: #{tpu_custom_call.1} parent=27 // pred_check
          %p643 = pneg %p110
        $region54: #{tpu_custom_call.1} parent=27 // pred_check_branch
          %645 = sbr.rel (%p643) target = $region56
        $region55: #{tpu_custom_call.1} parent=27 // pred_region
          %s647 = ssub.s32 128, 128
          %648 = vsyncadd %s639, %s647
          %s649 = smul.addr %s26, 128
          %s650 = scalar_lea.hbm %s2, %s649
          %s652 = sshll.u32 %s642, 4
          %s653 = int_to_ptr.vmem [resolvable:$true] %s652
          %655 = dma.vmem_to_hbm [thread:$0]  %s653, 128, %s650, %s639
        $region56: #{tpu_custom_call.1} parent=27 // pred_fallthru
          _
      $region28: #{tpu_custom_call.1} parent=5 // pred_fallthru
        _
      %p656 = scmp.le.s32.totalorder 2, %s17
      // Predicated region
      $region57: #{tpu_custom_call.1} parent=5 // pred_check
        %p657 = pneg %p656
      $region58: #{tpu_custom_call.1} parent=5 // pred_check_branch
        %659 = sbr.rel (%p657) target = $region60
      $region59: #{tpu_custom_call.1} parent=5 // pred_region
        %s660 = ssub.s32 %s17, 2
        // Predicated region
        $region61: #{tpu_custom_call.1} parent=59 // pred_check
          %p661 = pneg %p116
        $region62: #{tpu_custom_call.1} parent=59 // pred_check_branch
          %663 = sbr.rel (%p661) target = $region64
        $region63: #{tpu_custom_call.1} parent=59 // pred_region
          %s664 = sand.u32 %s101, 1
          %s665 = scalar_lea.sflag [#allocation5], %s664
          %s666 = sand.u32 %s101, 1
          %s667 = smul.addr %s666, 8
          %s668 = scalar_lea.vmem [#allocation8], %s667
          %669 = dma.done %s665, 128
        $region64: #{tpu_custom_call.1} parent=59 // pred_fallthru
          _
      $region60: #{tpu_custom_call.1} parent=5 // pred_fallthru
        _
    $region6: #{tpu_custom_call.1} parent=1 // loop_footer
      %s21 = sadd.s32 1, %s17
    $region7: #{tpu_custom_call.1} parent=1 // loop_footer_branch
      %16 = sbr.rel target = $region3
    $region8: #{tpu_custom_call.1} parent=1 // loop_exit
      _
    %670 = vsyncpa [#allocation4], 1
    %s671 = scalar_lea.sflag [#allocation4], 1
    %672 = vsyncpa %s671, 1
    %673 = vsyncpa [#allocation7], 1
    %s674 = scalar_lea.sflag [#allocation7], 1
    %675 = vsyncpa %s674, 1
    %676 = vsyncpa [#allocation5], 1
    %s677 = scalar_lea.sflag [#allocation5], 1
    %678 = vsyncpa %s677, 1

</llo_original>
